<compile_context>
chip_gen: v6e
topology: v6e:2x2x1
jax: 0.10.0
libtpu: 0.0.40
codegen_flags: <defaults>
</compile_context>

<pallas_src>
import jax
import jax.numpy as jnp
from jax.experimental import pallas as pl
from jax.experimental.pallas import tpu as pltpu


def _round_up(n, m):
    return ((n + m - 1) // m) * m


# ----------------------------------------------------------------------------
# Pallas kernel: one batch tile in transposed (D, TB) layout.
#   3x (band-matmul conv + bias + relu) on the MXU (bf16 operands, f32 acc),
#   then conv4 as VPU multiply + sublane reduce, sigmoid, scale by p_max.
# ----------------------------------------------------------------------------
def cnn_kernel(scal_ref, x_ref, w1_ref, w2_ref, w3_ref, w4_ref, o_ref):
    # scal_ref : SMEM (5,) f32   = [b1, b2, b3, b4, p_max]
    # x_ref    : VMEM (D, TB) bf16   (batch on the lane axis)
    # w1..w3   : VMEM (D, D) bf16 transposed band matrices (grid-invariant)
    # w4_ref   : VMEM (D, 1) f32  conv4 weights as a column
    # o_ref    : VMEM (1, TB) f32 (lane-dense output row)
    b1 = scal_ref[0]
    b2 = scal_ref[1]
    b3 = scal_ref[2]
    b4 = scal_ref[3]
    p_max = scal_ref[4]

    h = x_ref[...]  # (D, TB) bf16
    for w_ref, b in ((w1_ref, b1), (w2_ref, b2), (w3_ref, b3)):
        # (D, D) bf16 @ (D, TB) bf16 -> f32 accumulation: native MXU path on
        # v5e/v6e/v7x; N = TB is fully lane-dense.
        h = jnp.dot(w_ref[...], h.astype(jnp.bfloat16),
                    preferred_element_type=jnp.float32) + b
        h = jnp.maximum(h, 0.0)

    # conv4 (kernel (D,1)) == dot over D.  VPU multiply + XLU sublane reduce
    # instead of an M=1 MXU matmul (VPU/XLU slots are otherwise idle here).
    logits = jnp.sum(h * w4_ref[...], axis=0, keepdims=True) + b4  # (1, TB)
    o_ref[...] = p_max * jax.nn.sigmoid(logits)


# ----------------------------------------------------------------------------
# Parameter setup (done ONCE, hoisted out of the forward pass):
# turn the 10-tap conv weights into exact transposed banded (D, D) matrices so
# each conv on (D, TB) activations is  y = Wt @ h,
#   Wt[o, i] = taps[i - o + 4]   when 0 <= i - o + 4 <= 9, else 0
# (PyTorch 'same', even kernel 10: pad 4 before / 5 after, cross-correlation).
# ----------------------------------------------------------------------------
def band_matrix_T_from_taps(taps, D):
    o = jnp.arange(D)[:, None]   # output index (row)
    i = jnp.arange(D)[None, :]   # input index  (col)
    k = i - o + 4
    valid = (k >= 0) & (k <= 9)
    return jnp.where(valid, taps[jnp.clip(k, 0, 9)], 0.0).astype(jnp.float32)


def make_params(key, D, p_max):
    ks = jax.random.split(key, 8)
    scale = 0.3
    # Conv taps stored bf16-quantized (upcast so the f32 reference uses exactly
    # the same values the kernel's bf16 band matrices encode).
    taps = tuple(
        (scale * jax.random.normal(ks[i], (10,), jnp.float32))
        .astype(jnp.bfloat16).astype(jnp.float32)
        for i in range(3)
    )
    w4 = scale * jax.random.normal(ks[3], (D,), jnp.float32)
    biases = [0.05 * jax.random.normal(ks[4 + i], (), jnp.float32) for i in range(4)]

    # Hoisted: transposed band matrices built once, cast to bf16 for the MXU
    # (exact cast -- the taps are already bf16-representable).
    w_band_t = tuple(band_matrix_T_from_taps(t, D).astype(jnp.bfloat16) for t in taps)

    return dict(
        taps=taps,                                   # f32 (reference)
        w_band_t=w_band_t,                           # bf16 (D, D) x3 (kernel)
        w4=w4,                                       # f32 (D,) (reference)
        w4_col=w4.reshape(D, 1).astype(jnp.float32), # f32 (D, 1) (kernel)
        scalars=jnp.stack(biases + [jnp.float32(p_max)]),  # (5,) -> SMEM
    )


# ----------------------------------------------------------------------------
# Forward wrapper.
# ----------------------------------------------------------------------------
def cnn_model_forward(x, params):
    """x: (B, D) float32 -> (B, 1, 1, 1) float32 (matches PyTorch output)."""
    B, D = x.shape
    W1t, W2t, W3t = params["w_band_t"]
    w4col = params["w4_col"]
    scal = params["scalars"]

    # Lane-dense transposed layout, bf16 input (transpose + cast fuse into one
    # wrapper pass; no jnp.pad copy of x is made).
    x_t = jnp.transpose(x).astype(jnp.bfloat16)      # (D, B)

    # Batch tile: whole batch when small (block dim == full array dim is
    # always legal), otherwise a multiple of 128 with >= 2 grid steps so both
    # v7x TensorCores get work, capped at 2048 (VMEM per tile is tiny).
    if B <= 256:
        TB = B
    else:
        TB = min(2048, _round_up(pl.cdiv(B, 2), 128))
    grid = (pl.cdiv(B, TB),)

    cost = pl.CostEstimate(
        flops=int(2 * B * D * D * 3 + 2 * B * D),
        transcendentals=int(B),                       # one exp per sigmoid
        bytes_accessed=int(B * D * 2 + 3 * D * D * 2 + D * 4 + B * 4 + 5 * 4),
    )

    out_row = pl.pallas_call(
        cnn_kernel,
        grid=grid,
        out_shape=jax.ShapeDtypeStruct((1, B), jnp.float32),
        in_specs=[
            pl.BlockSpec(memory_space=pltpu.MemorySpace.SMEM),  # [b1..b4, p_max]
            pl.BlockSpec((D, TB), lambda i: (0, i)),            # x tile (pipelined)
            pl.BlockSpec((D, D), lambda i: (0, 0)),             # W1^T (VMEM-resident)
            pl.BlockSpec((D, D), lambda i: (0, 0)),             # W2^T (VMEM-resident)
            pl.BlockSpec((D, D), lambda i: (0, 0)),             # W3^T (VMEM-resident)
            pl.BlockSpec((D, 1), lambda i: (0, 0)),             # w4 column (resident)
        ],
        out_specs=pl.BlockSpec((1, TB), lambda i: (0, i)),      # lane-dense output
        compiler_params=pltpu.CompilerParams(
            dimension_semantics=("parallel",),                  # 2 TCs on v7x
        ),
        cost_estimate=cost,
    )(scal, x_t, W1t, W2t, W3t, w4col)

    # (1, B) row-major == B outputs in batch order.
    return out_row.reshape(B, 1, 1, 1)


# ----------------------------------------------------------------------------
# Pure-JAX f32 reference (tap-unrolled conv, PyTorch 'same' padding 4/5).
# Uses the same (bf16-representable) weights; the kernel additionally rounds
# x / activations to bf16 before each MXU dot, hence the relaxed tolerance.
# ----------------------------------------------------------------------------
def reference_forward(x, params):
    B, D = x.shape
    s = params["scalars"]

    def conv_same(h, taps, bias):
        hp = jnp.pad(h, ((0, 0), (4, 5)))
        out = jnp.zeros_like(h)
        for k in range(10):
            out = out + taps[k] * hp[:, k:k + D]
        return out + bias

    h = x.astype(jnp.float32)
    for i, t in enumerate(params["taps"]):
        h = jnp.maximum(conv_same(h, t, s[i]), 0.0)
    logits = h @ params["w4"].reshape(D, 1) + s[3]
    return (s[4] * jax.nn.sigmoid(logits)).reshape(B, 1, 1, 1)


if __name__ == "__main__":
    B, D = 2, 16          # batch=2, inputDim=16
    p_max = 5.0           # args.p_max

    key = jax.random.PRNGKey(0)
    kx, kp = jax.random.split(key)
    x = jax.random.normal(kx, (B, D), jnp.float32)
    params = make_params(kp, D, p_max)

    out = jax.jit(cnn_model_forward)(x, params)
    out = jax.block_until_ready(out)

    ref = reference_forward(x, params)
    assert out.shape == (B, 1, 1, 1)
    # Tolerance relaxed vs. the pure-f32 reference because the kernel runs the
    # three conv matmuls with bf16 operands (f32 accumulation).
    assert jnp.allclose(out, ref, rtol=2e-2, atol=5e-2), (out, ref)

    print("KERNEL_OK")
</pallas_src>

<mosaic_0001>
module attributes {stable_mosaic.version = 11 : i64} {
  func.func @cnn_kernel(%arg0: i32, %arg1: memref<5xf32, #tpu.memory_space<smem>>, %arg2: memref<16x2xbf16, #tpu.memory_space<vmem>>, %arg3: memref<16x16xbf16, #tpu.memory_space<vmem>>, %arg4: memref<16x16xbf16, #tpu.memory_space<vmem>>, %arg5: memref<16x16xbf16, #tpu.memory_space<vmem>>, %arg6: memref<16x1xf32, #tpu.memory_space<vmem>>, %arg7: memref<1x2xf32, #tpu.memory_space<vmem>>) attributes {dimension_semantics = [#tpu.dimension_semantics<parallel>], iteration_bounds = array<i64: 1>, scalar_prefetch = 0 : i64, scratch_operands = 0 : i64, tpu.core_type = #tpu.core_type<tc>, window_params = [{transform_indices = @transform_0, window_bounds = array<i64: 5>}, {transform_indices = @transform_1, window_bounds = array<i64: 16, 2>}, {pipeline_mode = #tpu.pipeline_mode<synchronous>, transform_indices = @transform_2, window_bounds = array<i64: 16, 16>}, {pipeline_mode = #tpu.pipeline_mode<synchronous>, transform_indices = @transform_3, window_bounds = array<i64: 16, 16>}, {pipeline_mode = #tpu.pipeline_mode<synchronous>, transform_indices = @transform_4, window_bounds = array<i64: 16, 16>}, {pipeline_mode = #tpu.pipeline_mode<synchronous>, transform_indices = @transform_5, window_bounds = array<i64: 16, 1>}, {transform_indices = @transform_6, window_bounds = array<i64: 1, 2>}]} {
    %c0 = arith.constant 0 : index
    %0 = memref.load %arg1[%c0] : memref<5xf32, #tpu.memory_space<smem>>
    %c1 = arith.constant 1 : index
    %1 = memref.load %arg1[%c1] : memref<5xf32, #tpu.memory_space<smem>>
    %c2 = arith.constant 2 : index
    %2 = memref.load %arg1[%c2] : memref<5xf32, #tpu.memory_space<smem>>
    %c3 = arith.constant 3 : index
    %3 = memref.load %arg1[%c3] : memref<5xf32, #tpu.memory_space<smem>>
    %c4 = arith.constant 4 : index
    %4 = memref.load %arg1[%c4] : memref<5xf32, #tpu.memory_space<smem>>
    %c0_0 = arith.constant 0 : index
    %c0_1 = arith.constant 0 : index
    %5 = vector.load %arg2[%c0_0, %c0_1] : memref<16x2xbf16, #tpu.memory_space<vmem>>, vector<16x2xbf16>
    %c0_2 = arith.constant 0 : index
    %c0_3 = arith.constant 0 : index
    %6 = vector.load %arg3[%c0_2, %c0_3] : memref<16x16xbf16, #tpu.memory_space<vmem>>, vector<16x16xbf16>
    %cst = arith.constant dense<0.000000e+00> : vector<16x2xf32>
    %7 = tpu.matmul %6, %5, %cst {dimension_numbers = #tpu.dot_dimension_numbers<[1], [0], [0], [1], [0, 0, 1, 1], [], []>} : vector<16x16xbf16>, vector<16x2xbf16>, vector<16x2xf32> -> vector<16x2xf32>
    %8 = vector.broadcast %0 : f32 to vector<16x2xf32>
    %9 = arith.addf %7, %8 : vector<16x2xf32>
    %cst_4 = arith.constant 0.000000e+00 : f32
    %10 = vector.broadcast %cst_4 : f32 to vector<16x2xf32>
    %11 = arith.maximumf %9, %10 : vector<16x2xf32>
    %c0_5 = arith.constant 0 : index
    %c0_6 = arith.constant 0 : index
    %12 = vector.load %arg4[%c0_5, %c0_6] : memref<16x16xbf16, #tpu.memory_space<vmem>>, vector<16x16xbf16>
    %13 = arith.truncf %11 : vector<16x2xf32> to vector<16x2xbf16>
    %cst_7 = arith.constant dense<0.000000e+00> : vector<16x2xf32>
    %14 = tpu.matmul %12, %13, %cst_7 {dimension_numbers = #tpu.dot_dimension_numbers<[1], [0], [0], [1], [0, 0, 1, 1], [], []>} : vector<16x16xbf16>, vector<16x2xbf16>, vector<16x2xf32> -> vector<16x2xf32>
    %15 = vector.broadcast %1 : f32 to vector<16x2xf32>
    %16 = arith.addf %14, %15 : vector<16x2xf32>
    %cst_8 = arith.constant 0.000000e+00 : f32
    %17 = vector.broadcast %cst_8 : f32 to vector<16x2xf32>
    %18 = arith.maximumf %16, %17 : vector<16x2xf32>
    %c0_9 = arith.constant 0 : index
    %c0_10 = arith.constant 0 : index
    %19 = vector.load %arg5[%c0_9, %c0_10] : memref<16x16xbf16, #tpu.memory_space<vmem>>, vector<16x16xbf16>
    %20 = arith.truncf %18 : vector<16x2xf32> to vector<16x2xbf16>
    %cst_11 = arith.constant dense<0.000000e+00> : vector<16x2xf32>
    %21 = tpu.matmul %19, %20, %cst_11 {dimension_numbers = #tpu.dot_dimension_numbers<[1], [0], [0], [1], [0, 0, 1, 1], [], []>} : vector<16x16xbf16>, vector<16x2xbf16>, vector<16x2xf32> -> vector<16x2xf32>
    %22 = vector.broadcast %2 : f32 to vector<16x2xf32>
    %23 = arith.addf %21, %22 : vector<16x2xf32>
    %cst_12 = arith.constant 0.000000e+00 : f32
    %24 = vector.broadcast %cst_12 : f32 to vector<16x2xf32>
    %25 = arith.maximumf %23, %24 : vector<16x2xf32>
    %c0_13 = arith.constant 0 : index
    %c0_14 = arith.constant 0 : index
    %26 = vector.load %arg6[%c0_13, %c0_14] : memref<16x1xf32, #tpu.memory_space<vmem>>, vector<16x1xf32>
    %27 = vector.broadcast %26 : vector<16x1xf32> to vector<16x2xf32>
    %28 = arith.mulf %25, %27 : vector<16x2xf32>
    %cst_15 = arith.constant dense<0.000000e+00> : vector<2xf32>
    %29 = vector.multi_reduction <add>, %28, %cst_15 [0] : vector<16x2xf32> to vector<2xf32>
    %30 = vector.shape_cast %29 : vector<2xf32> to vector<1x2xf32>
    %31 = vector.broadcast %3 : f32 to vector<1x2xf32>
    %32 = arith.addf %30, %31 : vector<1x2xf32>
    %33 = arith.negf %32 : vector<1x2xf32>
    %34 = math.exp %33 : vector<1x2xf32>
    %cst_16 = arith.constant 1.000000e+00 : f32
    %35 = vector.broadcast %cst_16 : f32 to vector<1x2xf32>
    %36 = arith.addf %35, %34 : vector<1x2xf32>
    %37 = arith.divf %35, %36 : vector<1x2xf32>
    %38 = vector.broadcast %4 : f32 to vector<1x2xf32>
    %39 = arith.mulf %38, %37 : vector<1x2xf32>
    %c0_17 = arith.constant 0 : index
    %c0_18 = arith.constant 0 : index
    %40 = vector.load %arg7[%c0_17, %c0_18] : memref<1x2xf32, #tpu.memory_space<vmem>>, vector<1x2xf32>
    tpu.vector_store %arg7[%c0_17, %c0_18], %39 {strides = array<i32>} : memref<1x2xf32, #tpu.memory_space<vmem>>, vector<1x2xf32>,
    return
  }
  func.func @transform_0(%arg0: i32) -> i32 {
    %c0_i32 = arith.constant 0 : i32
    %c0_i32_0 = arith.constant 0 : i32
    return %c0_i32 : i32
  }
  func.func @transform_1(%arg0: i32) -> (i32, i32) {
    %c0_i32 = arith.constant 0 : i32
    %c0_i32_0 = arith.constant 0 : i32
    return %c0_i32, %arg0 : i32, i32
  }
  func.func @transform_2(%arg0: i32) -> (i32, i32) {
    %c0_i32 = arith.constant 0 : i32
    %c0_i32_0 = arith.constant 0 : i32
    %c0_i32_1 = arith.constant 0 : i32
    return %c0_i32, %c0_i32_0 : i32, i32
  }
  func.func @transform_3(%arg0: i32) -> (i32, i32) {
    %c0_i32 = arith.constant 0 : i32
    %c0_i32_0 = arith.constant 0 : i32
    %c0_i32_1 = arith.constant 0 : i32
    return %c0_i32, %c0_i32_0 : i32, i32
  }
  func.func @transform_4(%arg0: i32) -> (i32, i32) {
    %c0_i32 = arith.constant 0 : i32
    %c0_i32_0 = arith.constant 0 : i32
    %c0_i32_1 = arith.constant 0 : i32
    return %c0_i32, %c0_i32_0 : i32, i32
  }
  func.func @transform_5(%arg0: i32) -> (i32, i32) {
    %c0_i32 = arith.constant 0 : i32
    %c0_i32_0 = arith.constant 0 : i32
    %c0_i32_1 = arith.constant 0 : i32
    return %c0_i32, %c0_i32_0 : i32, i32
  }
  func.func @transform_6(%arg0: i32) -> (i32, i32) {
    %c0_i32 = arith.constant 0 : i32
    %c0_i32_0 = arith.constant 0 : i32
    return %c0_i32, %arg0 : i32, i32
  }
}

</mosaic_0001>

<llo_original>
// kernel: cnn_model_forward.1
$region0: #{cnn_model_forward.1}
  #allocation0 [shape = 'u32[]', space=smem, size = 0x4, offset = 0x4, fixed_abs, tag = 'smem constant byte address 0x4 - core index']
  #allocation1 [shape = 'u32[144,128]{1,0:T(1,128)}', space=vmem, size = 0x12000, scoped, tag = 'internal scratch']
  %s0 = inlined_call_operand.vmem [shape: f32[5], index: 0, kind: input, shape index: {}]
  %s1 = inlined_call_operand.vmem [shape: bf16[16,2], index: 1, kind: input, shape index: {}]
  %s2 = inlined_call_operand.vmem [shape: bf16[16,16], index: 2, kind: input, shape index: {}]
  %s3 = inlined_call_operand.vmem [shape: bf16[16,16], index: 3, kind: input, shape index: {}]
  %s4 = inlined_call_operand.vmem [shape: bf16[16,16], index: 4, kind: input, shape index: {}]
  %s5 = inlined_call_operand.vmem [shape: f32[16,1], index: 5, kind: input, shape index: {}]
  %s6 = inlined_call_operand.hbm [shape: f32[1,2], index: 6, kind: output, shape index: {}]
  %s7 = sld [smem:[#allocation0]]
  $region38: #{cnn_model_forward.1} parent=0
    _
  %s9 = ssub.s32 1, %s7
  %s10 = scalar_select 0, %s9, %s7
  $region1: #{cnn_model_forward.1} parent=0
    #allocation2 [shape = 'u8[512]{0}', space=smem, size = 0x200, scoped, tag = 'input window, operand 0, single buffered']
    #allocation3 [shape = 's32[1]{0}', space=sflag, size = 0x4, scoped, tag = 'scoped memory for cnn_model_forward.1']
    #allocation4 [shape = 's32[1]{0}', space=sflag, size = 0x4, scoped, tag = 'scoped memory for cnn_model_forward.1']
    #allocation5 [shape = 'u8[512]{0}', space=vmem, size = 0x400, scoped, tag = 'output window, operand 0, single buffered']
    %11 = vsyncpa [#allocation4], 0
    %12 = vsyncpa [#allocation3], 0
    // Predicated region
    $region2: #{cnn_model_forward.1} parent=1 // pred_check
      _
    $region3: #{cnn_model_forward.1} parent=1 // pred_check_branch
      %14 = sbr.rel (0) target = $region5
    $region4: #{cnn_model_forward.1} parent=1 // pred_region
      %s16 = ssub.s32 16, 16
      %17 = vsyncadd [#allocation4], %s16
      %s19 = sshll.u32 %s0, 4
      %s20 = int_to_ptr.vmem [resolvable:$true] %s19
      %22 = dma.vmem_to_smem %s20, 16, [#allocation2], [#allocation4]
    $region5: #{cnn_model_forward.1} parent=1 // pred_fallthru
      _
    // Predicated region
    $region6: #{cnn_model_forward.1} parent=1 // pred_check
      _
    $region7: #{cnn_model_forward.1} parent=1 // pred_check_branch
      %24 = sbr.rel (0) target = $region9
    $region8: #{cnn_model_forward.1} parent=1 // pred_region
      _
    $region9: #{cnn_model_forward.1} parent=1 // pred_fallthru
      _
    // Predicated region
    $region10: #{cnn_model_forward.1} parent=1 // pred_check
      _
    $region11: #{cnn_model_forward.1} parent=1 // pred_check_branch
      %26 = sbr.rel (0) target = $region13
    $region12: #{cnn_model_forward.1} parent=1 // pred_region
      _
    $region13: #{cnn_model_forward.1} parent=1 // pred_fallthru
      _
    // Predicated region
    $region14: #{cnn_model_forward.1} parent=1 // pred_check
      _
    $region15: #{cnn_model_forward.1} parent=1 // pred_check_branch
      %28 = sbr.rel (0) target = $region17
    $region16: #{cnn_model_forward.1} parent=1 // pred_region
      _
    $region17: #{cnn_model_forward.1} parent=1 // pred_fallthru
      _
    // Predicated region
    $region18: #{cnn_model_forward.1} parent=1 // pred_check
      _
    $region19: #{cnn_model_forward.1} parent=1 // pred_check_branch
      %30 = sbr.rel (0) target = $region21
    $region20: #{cnn_model_forward.1} parent=1 // pred_region
      _
    $region21: #{cnn_model_forward.1} parent=1 // pred_fallthru
      _
    // Predicated region
    $region22: #{cnn_model_forward.1} parent=1 // pred_check
      _
    $region23: #{cnn_model_forward.1} parent=1 // pred_check_branch
      %32 = sbr.rel (0) target = $region25
    $region24: #{cnn_model_forward.1} parent=1 // pred_region
      _
    $region25: #{cnn_model_forward.1} parent=1 // pred_fallthru
      _
    // Predicated region
    $region26: #{cnn_model_forward.1} parent=1 // pred_check
      _
    $region27: #{cnn_model_forward.1} parent=1 // pred_check_branch
      %34 = sbr.rel (0) target = $region29
    $region28: #{cnn_model_forward.1} parent=1 // pred_region
      %35 = dma.done [#allocation4], 16
    $region29: #{cnn_model_forward.1} parent=1 // pred_fallthru
      _
    %36 = sfence
    %s38 = sld [smem:[#allocation2]]
    %s39 = sld [smem:[#allocation2 + $0x1]]
    %s40 = sld [smem:[#allocation2 + $0x2]]
    %s41 = sld [smem:[#allocation2 + $0x3]]
    %s42 = sld [smem:[#allocation2 + $0x4]]
    %v43 = vld [vmem:[%s1] sm:$0xf]
    %v44 = vld [vmem:[%s1 + $0x4] sm:$0xf]
    %v45 = vld [vmem:[%s2] sm:$0xf]
    %v46 = vld [vmem:[%s2 + $0x4] sm:$0xf]
    %v47 = vstv %s38
    %v50 = vunpack.c.l.b16 %v45
    %v51 = vunpack.c.l.b16 %v46
    %v52 = vpack.c.b16 %v51, %v50
    %v55 = vunpack.c.l.b16 %v43
    %v56 = vunpack.c.l.b16 %v44
    %v57 = vpack.c.b16 %v56, %v55
    %vm59 = vcmask 130048
    %v61 = vsel %vm59, %v52, 0
    %63 = vmatprep.subr.bf16.mxu0 0
    %64 = vmatpush1.bf16.msra.mxu0 0
    %65 = vmatprep.subr.bf16.mxu0 0
    %66 = vmatpush1.bf16.msra.mxu0 0
    %67 = vmatprep.subr.bf16.mxu0 0
    %68 = vmatpush1.bf16.msra.mxu0 0
    %69 = vmatprep.subr.bf16.mxu0 0
    %70 = vmatpush1.bf16.msra.mxu0 0
    %71 = vmatprep.subr.bf16.mxu0 0
    %72 = vmatpush1.bf16.msra.mxu0 0
    %73 = vmatprep.subr.bf16.mxu0 0
    %74 = vmatpush1.bf16.msra.mxu0 0
    %75 = vmatprep.subr.bf16.mxu0 0
    %76 = vmatpush1.bf16.msra.mxu0 0
    %77 = vmatprep.subr.bf16.mxu0 0
    %78 = vmatpush1.bf16.msra.mxu0 %v57
    %79 = vmatprep.subr.bf16.mxu0 0
    %80 = vmatpush2.bf16.msra.mxu0 0
    %81 = vmatprep.subr.bf16.mxu0 0
    %82 = vmatpush2.bf16.msra.mxu0 0
    %83 = vmatprep.subr.bf16.mxu0 0
    %84 = vmatpush2.bf16.msra.mxu0 0
    %85 = vmatprep.subr.bf16.mxu0 0
    %86 = vmatpush2.bf16.msra.mxu0 0
    %87 = vmatprep.subr.bf16.mxu0 0
    %88 = vmatpush2.bf16.msra.mxu0 0
    %89 = vmatprep.subr.bf16.mxu0 0
    %90 = vmatpush2.bf16.msra.mxu0 0
    %91 = vmatprep.subr.bf16.mxu0 0
    %92 = vmatpush2.bf16.msra.mxu0 0
    %93 = vmatprep.subr.bf16.mxu0 0
    %94 = vmatpush2.bf16.msra.mxu0 0
    %95 = vmatprep.mubr.bf16.mxu0 0
    %96 = vmatmul.mubr.bf16.gmra.mxu0 %v61
    %v97 = vpop.f32.mrf.mxu0
    %v98 = vadd.f32 %v47, %v97
    %v99 = vpop.f32.mrf.mxu0
    %v100 = vpop.f32.mrf.mxu0
    %v101 = vadd.f32 %v47, %v100
    %v102 = vpop.f32.mrf.mxu0
    %103 = vdwg.mxu0
    %v104 = vmax.f32 %v98, 0.0
    %v105 = vmax.f32 %v101, 0.0
    %v106 = vld [vmem:[%s3] sm:$0xf]
    %v107 = vld [vmem:[%s3 + $0x4] sm:$0xf]
    %v108 = vpack.c.bf16 %v105, %v104
    %v109 = vstv %s39
    %v112 = vunpack.c.l.b16 %v106
    %v113 = vunpack.c.l.b16 %v107
    %v114 = vpack.c.b16 %v113, %v112
    %v116 = vsel %vm59, %v114, 0
    %118 = vmatprep.subr.bf16.mxu0 0
    %119 = vmatpush1.bf16.msra.mxu0 0
    %120 = vmatprep.subr.bf16.mxu0 0
    %121 = vmatpush1.bf16.msra.mxu0 0
    %122 = vmatprep.subr.bf16.mxu0 0
    %123 = vmatpush1.bf16.msra.mxu0 0
    %124 = vmatprep.subr.bf16.mxu0 0
    %125 = vmatpush1.bf16.msra.mxu0 0
    %126 = vmatprep.subr.bf16.mxu0 0
    %127 = vmatpush1.bf16.msra.mxu0 0
    %128 = vmatprep.subr.bf16.mxu0 0
    %129 = vmatpush1.bf16.msra.mxu0 0
    %130 = vmatprep.subr.bf16.mxu0 0
    %131 = vmatpush1.bf16.msra.mxu0 0
    %132 = vmatprep.subr.bf16.mxu0 0
    %133 = vmatpush1.bf16.msra.mxu0 %v108
    %134 = vmatprep.subr.bf16.mxu0 0
    %135 = vmatpush2.bf16.msra.mxu0 0
    %136 = vmatprep.subr.bf16.mxu0 0
    %137 = vmatpush2.bf16.msra.mxu0 0
    %138 = vmatprep.subr.bf16.mxu0 0
    %139 = vmatpush2.bf16.msra.mxu0 0
    %140 = vmatprep.subr.bf16.mxu0 0
    %141 = vmatpush2.bf16.msra.mxu0 0
    %142 = vmatprep.subr.bf16.mxu0 0
    %143 = vmatpush2.bf16.msra.mxu0 0
    %144 = vmatprep.subr.bf16.mxu0 0
    %145 = vmatpush2.bf16.msra.mxu0 0
    %146 = vmatprep.subr.bf16.mxu0 0
    %147 = vmatpush2.bf16.msra.mxu0 0
    %148 = vmatprep.subr.bf16.mxu0 0
    %149 = vmatpush2.bf16.msra.mxu0 0
    %150 = vmatprep.mubr.bf16.mxu0 0
    %151 = vmatmul.mubr.bf16.gmra.mxu0 %v116
    %v152 = vpop.f32.mrf.mxu0
    %v153 = vadd.f32 %v109, %v152
    %v154 = vpop.f32.mrf.mxu0
    %v155 = vpop.f32.mrf.mxu0
    %v156 = vadd.f32 %v109, %v155
    %v157 = vpop.f32.mrf.mxu0
    %158 = vdwg.mxu0
    %v159 = vmax.f32 %v153, 0.0
    %v160 = vmax.f32 %v156, 0.0
    %v161 = vld [vmem:[%s4] sm:$0xf]
    %v162 = vld [vmem:[%s4 + $0x4] sm:$0xf]
    %v163 = vpack.c.bf16 %v160, %v159
    %v164 = vstv %s40
    %v167 = vunpack.c.l.b16 %v161
    %v168 = vunpack.c.l.b16 %v162
    %v169 = vpack.c.b16 %v168, %v167
    %v171 = vsel %vm59, %v169, 0
    %173 = vmatprep.subr.bf16.mxu0 0
    %174 = vmatpush1.bf16.msra.mxu0 0
    %175 = vmatprep.subr.bf16.mxu0 0
    %176 = vmatpush1.bf16.msra.mxu0 0
    %177 = vmatprep.subr.bf16.mxu0 0
    %178 = vmatpush1.bf16.msra.mxu0 0
    %179 = vmatprep.subr.bf16.mxu0 0
    %180 = vmatpush1.bf16.msra.mxu0 0
    %181 = vmatprep.subr.bf16.mxu0 0
    %182 = vmatpush1.bf16.msra.mxu0 0
    %183 = vmatprep.subr.bf16.mxu0 0
    %184 = vmatpush1.bf16.msra.mxu0 0
    %185 = vmatprep.subr.bf16.mxu0 0
    %186 = vmatpush1.bf16.msra.mxu0 0
    %187 = vmatprep.subr.bf16.mxu0 0
    %188 = vmatpush1.bf16.msra.mxu0 %v163
    %189 = vmatprep.subr.bf16.mxu0 0
    %190 = vmatpush2.bf16.msra.mxu0 0
    %191 = vmatprep.subr.bf16.mxu0 0
    %192 = vmatpush2.bf16.msra.mxu0 0
    %193 = vmatprep.subr.bf16.mxu0 0
    %194 = vmatpush2.bf16.msra.mxu0 0
    %195 = vmatprep.subr.bf16.mxu0 0
    %196 = vmatpush2.bf16.msra.mxu0 0
    %197 = vmatprep.subr.bf16.mxu0 0
    %198 = vmatpush2.bf16.msra.mxu0 0
    %199 = vmatprep.subr.bf16.mxu0 0
    %200 = vmatpush2.bf16.msra.mxu0 0
    %201 = vmatprep.subr.bf16.mxu0 0
    %202 = vmatpush2.bf16.msra.mxu0 0
    %203 = vmatprep.subr.bf16.mxu0 0
    %204 = vmatpush2.bf16.msra.mxu0 0
    %205 = vmatprep.mubr.bf16.mxu0 0
    %206 = vmatmul.mubr.bf16.gmra.mxu0 %v171
    %v207 = vpop.f32.mrf.mxu0
    %v208 = vadd.f32 %v164, %v207
    %v209 = vpop.f32.mrf.mxu0
    %v210 = vpop.f32.mrf.mxu0
    %v211 = vadd.f32 %v164, %v210
    %v212 = vpop.f32.mrf.mxu0
    %213 = vdwg.mxu0
    %v214 = vmax.f32 %v208, 0.0
    %v215 = vmax.f32 %v211, 0.0
    %v216 = vld [vmem:[%s5] sm:$0xff]
    %v217 = vld [vmem:[%s5 + $0x8] sm:$0xff]
    %219 = vset.pattern.permute.xlu0 0
    %220 = vperm.xlu0 %219, %v216
    %v221 = vpop.permute.xlu0 %220
    %224 = vset.pattern.permute.xlu0 0
    %225 = vperm.xlu0 %224, %v217
    %v226 = vpop.permute.xlu0 %225
    %v228 = vmul.f32 %v214, %v221
    %v229 = vmul.f32 %v215, %v226
    %vm230 = vcmask 15360
    %v231 = vsel %vm230, %v228, 0.0
    %v232 = vsel %vm230, %v229, 0.0
    %v233 = vadd.f32 %v231, %v232
    %v234 = vrot.slane %v233, 4
    %v235 = vadd.f32 %v233, %v234
    %v236 = vrot.slane %v235, 2
    %v237 = vadd.f32 %v235, %v236
    %v238 = vrot.slane %v237, 1
    %v239 = vadd.f32 %v237, %v238
    %v240 = vstv %s41
    %v241 = vadd.f32 %v239, %v240
    %v242 = vxor.u32 %v241, 2147483648
    %v243 = vmul.f32 %v242, 1.442695
    %v244 = vpow.pop %v243
    %v245 = vadd.f32 %v244, 1.0
    %v246 = vrcp.pop %v245
    %v247 = vmul.f32 1.0, %v246
    %v248 = vstv %s42
    %v249 = vmul.f32 %v248, %v247
    %vm250 = vcmask 8192
    %251 = vst.msk [vmem:[#allocation5] sm:$0x1] %vm250, %v249
    // Predicated region
    $region30: #{cnn_model_forward.1} parent=1 // pred_check
      _
    $region31: #{cnn_model_forward.1} parent=1 // pred_check_branch
      %253 = sbr.rel (0) target = $region33
    $region32: #{cnn_model_forward.1} parent=1 // pred_region
      %s255 = ssub.s32 16, 16
      %256 = vsyncadd [#allocation3], %s255
      %s258 = sshll.u32 [#allocation5], 4
      %s259 = int_to_ptr.vmem [resolvable:$true] %s258
      %261 = dma.vmem_to_hbm [thread:$0]  %s259, 16, %s6, [#allocation3]
    $region33: #{cnn_model_forward.1} parent=1 // pred_fallthru
      _
    // Predicated region
    $region34: #{cnn_model_forward.1} parent=1 // pred_check
      _
    $region35: #{cnn_model_forward.1} parent=1 // pred_check_branch
      %263 = sbr.rel (0) target = $region37
    $region36: #{cnn_model_forward.1} parent=1 // pred_region
      %264 = dma.done [#allocation3], 16
    $region37: #{cnn_model_forward.1} parent=1 // pred_fallthru
      _
    %265 = vsyncpa [#allocation3], 1
    %266 = vsyncpa [#allocation4], 1

</llo_original>
